<compile_context>
chip_gen: v7x
topology: tpu7x:2x2x1
jax: 0.10.0
libtpu: 0.0.40
codegen_flags: <defaults>
</compile_context>

<pallas_src>
import jax
import jax.numpy as jnp
from jax.experimental import pallas as pl
from jax.experimental.pallas import tpu as pltpu

_LANE = 128
_SUBLANE = 8
_MAX_UNROLL = 32   # cap on the static in-kernel copy loop


def _tpu_params():
    """Generation-aware (block byte budget, min grid steps, vmem_limit_bytes)."""
    budget = 3 << 20        # conservative default: fits v5e's 16 MiB scoped VMEM
    min_steps = 2
    vmem_limit = None
    try:
        info = pltpu.get_tpu_info()
        vmem = int(info.vmem_capacity_bytes)
        budget = 6 << 20                       # larger blocks amortize ~0.35us/step
        vmem_limit = min(48 << 20, (vmem * 3) // 4)
        # v7x: 64 MiB VMEM per TensorCore and 2 TCs per chip -> keep >= 4
        # parallel grid steps so both cores get work; v5e/v6e are single-TC.
        min_steps = 4 if vmem <= (80 << 20) else 2
    except Exception:
        pass                                   # unknown chip / interpret mode
    return budget, min_steps, vmem_limit


def _make_kernel_4d(loop_len):
    # x_ref: (nb, g, cL, t) -> o_ref: (nb, cL, g, t).
    # Loop over the cpg tile: every store writes a whole (g, t) slab
    # (full-tile vst); the sublane-strided access is on the load side.
    def kernel(x_ref, o_ref):
        for i in range(loop_len):
            o_ref[:, i, :, :] = x_ref[:, :, i, :]
    return kernel


def _make_kernel_5d(loop_len, loop_over_g):
    # Spatial-minor layout: both channel axes are major dims, so slab copies
    # are full-tile on both sides; loop over the smaller channel axis.
    if loop_over_g:
        # x_ref: (nb, gL, cpg, tS, 128) -> o_ref: (nb, cpg, gL, tS, 128)
        def kernel(x_ref, o_ref):
            for j in range(loop_len):
                o_ref[:, :, j, :, :] = x_ref[:, j, :, :, :]
    else:
        # x_ref: (nb, g, cL, tS, 128) -> o_ref: (nb, cL, g, tS, 128)
        def kernel(x_ref, o_ref):
            for i in range(loop_len):
                o_ref[:, i, :, :, :] = x_ref[:, :, i, :, :]
    return kernel


def channel_shuffle(x, groups):
    """Pallas implementation of ChannelShuffle(groups)(x) for NCHW input."""
    N, C, H, W = x.shape
    g = int(groups)
    assert C % g == 0, "channels must be divisible by groups"
    cpg = C // g
    if g == 1 or cpg == 1:
        return x                               # permutation is the identity

    HW = H * W
    itemsize = jnp.dtype(x.dtype).itemsize
    budget, min_steps, vmem_limit = _tpu_params()

    # Layout choice: spatial-minor (S, 128) view whenever HW tiles exactly
    # into (8, 128) vregs -> fully dense loads AND stores.  Otherwise keep HW
    # as the lane axis and loop over cpg so at least the stores are full-tile.
    five_d = (HW % (_SUBLANE * _LANE)) == 0
    if five_d:
        S = HW // _LANE
        loop_over_g = g <= cpg
        loop_len = g if loop_over_g else cpg
        spatial_unit = _SUBLANE * _LANE        # split HW in 1024-element chunks
    else:
        loop_over_g = False
        loop_len = cpg
        spatial_unit = _LANE                   # split HW in 128-element chunks

    # Channel-loop tile: cap the static unroll; the remainder of the looped
    # channel axis becomes a third ("parallel") grid axis (8-aligned blocks,
    # ragged last block handled by Pallas masking).
    cL = loop_len if loop_len <= _MAX_UNROLL else _MAX_UNROLL
    grid_c = pl.cdiv(loop_len, cL)
    other_ch = cpg if loop_over_g else g
    ch_block_elems = other_ch * cL

    # Spatial tile: whole HW if a single-sample block fits the budget, else the
    # largest spatial_unit-aligned chunk that does (ragged last block is fine).
    bytes_per_hw = ch_block_elems * itemsize
    if bytes_per_hw * HW <= budget or HW <= spatial_unit:
        t_hw = HW
    else:
        t_hw = max(spatial_unit,
                   (budget // (bytes_per_hw * spatial_unit)) * spatial_unit)
    grid_s = pl.cdiv(HW, t_hw)

    # Batch tile: as many samples per block as fit the budget (ragged last ok).
    block_sample_bytes = bytes_per_hw * t_hw
    nb = int(max(1, min(N, budget // max(1, block_sample_bytes))))
    grid_n = pl.cdiv(N, nb)

    # Keep enough grid steps for pipelining (and both v7x TensorCores):
    # first shrink the batch tile, then split the spatial axis.
    if grid_n * grid_s * grid_c < min_steps and grid_n < N:
        need_n = min(N, pl.cdiv(min_steps, grid_s * grid_c))
        nb = max(1, N // need_n)
        grid_n = pl.cdiv(N, nb)
    if grid_n * grid_s * grid_c < min_steps:
        need_s = pl.cdiv(min_steps, grid_n * grid_c)
        if HW >= spatial_unit * need_s:
            t_hw = max(spatial_unit,
                       (HW // need_s) // spatial_unit * spatial_unit)
            grid_s = pl.cdiv(HW, t_hw)

    grid = (grid_n, grid_s, grid_c)

    cp_kwargs = dict(dimension_semantics=("parallel", "parallel", "parallel"))
    if vmem_limit is not None:
        cp_kwargs["vmem_limit_bytes"] = int(vmem_limit)
    compiler_params = pltpu.CompilerParams(**cp_kwargs)
    cost = pl.CostEstimate(flops=0, transcendentals=0,
                           bytes_accessed=2 * N * C * HW * itemsize)

    # TODO(synk): for bf16 / int8 inputs, pack lane pairs/quads to 32 bit with
    # pltpu.bitcast before the copy to avoid packed-sublane penalties on the
    # strided (load) side of the HW-minor path.

    if five_d:
        t_s = t_hw // _LANE
        xin = x.reshape(N, g, cpg, S, _LANE)               # contiguous (free)
        out_shape = jax.ShapeDtypeStruct((N, cpg, g, S, _LANE), x.dtype)
        if loop_over_g:
            in_spec = pl.BlockSpec((nb, cL, cpg, t_s, _LANE),
                                   lambda n, s, c: (n, c, 0, s, 0))
            out_spec = pl.BlockSpec((nb, cpg, cL, t_s, _LANE),
                                    lambda n, s, c: (n, 0, c, s, 0))
        else:
            in_spec = pl.BlockSpec((nb, g, cL, t_s, _LANE),
                                   lambda n, s, c: (n, 0, c, s, 0))
            out_spec = pl.BlockSpec((nb, cL, g, t_s, _LANE),
                                    lambda n, s, c: (n, c, 0, s, 0))
        kernel = _make_kernel_5d(cL, loop_over_g)
    else:
        xin = x.reshape(N, g, cpg, HW)                      # contiguous (free)
        out_shape = jax.ShapeDtypeStruct((N, cpg, g, HW), x.dtype)
        in_spec = pl.BlockSpec((nb, g, cL, t_hw),
                               lambda n, s, c: (n, 0, c, s))
        out_spec = pl.BlockSpec((nb, cL, g, t_hw),
                                lambda n, s, c: (n, c, 0, s))
        kernel = _make_kernel_4d(cL)

    out = pl.pallas_call(
        kernel,
        out_shape=out_shape,
        grid=grid,
        in_specs=[in_spec],
        out_specs=out_spec,
        compiler_params=compiler_params,
        cost_estimate=cost,
    )(xin)
    return out.reshape(N, C, H, W)


def channel_shuffle_ref(x, groups):
    """Pure-JAX reference mirroring the PyTorch forward exactly."""
    N, C, H, W = x.shape
    g = groups
    return (x.reshape(N, g, C // g, H, W)
             .transpose(0, 2, 1, 3, 4)
             .reshape(N, C, H, W))


if __name__ == "__main__":
    def _check(name, shape, groups):
        x = jax.random.normal(jax.random.PRNGKey(0), shape, dtype=jnp.float32)
        out = jax.block_until_ready(channel_shuffle(x, groups))
        ref = channel_shuffle_ref(x, groups)
        assert out.shape == x.shape and out.dtype == x.dtype, name
        assert jnp.array_equal(out, ref), f"Pallas channel shuffle mismatch: {name}"

    # Small smoke test consistent with the module (HW-minor path).
    _check("smoke", (2, 4, 16, 16), 2)
    # ShuffleNet-like shape: g=8, odd spatial size (HW=196, not 128-aligned).
    _check("shufflenet", (2, 232, 14, 14), 8)
    # Spatial-minor (S,128) path: HW = 1024 tiles exactly into (8,128) vregs.
    _check("spatial_minor", (2, 16, 32, 32), 4)
    # Large cpg (80 > unroll cap 32): exercises the ragged channel grid axis.
    _check("large_cpg", (2, 240, 8, 8), 3)

    print("KERNEL_OK")
</pallas_src>

<mosaic_0001>
module attributes {stable_mosaic.version = 11 : i64} {
  func.func @kernel(%arg0: i32, %arg1: i32, %arg2: i32, %arg3: memref<1x2x2x256xf32, #tpu.memory_space<vmem>>, %arg4: memref<1x2x2x256xf32, #tpu.memory_space<vmem>>) attributes {dimension_semantics = [#tpu.dimension_semantics<parallel>, #tpu.dimension_semantics<parallel>, #tpu.dimension_semantics<parallel>], iteration_bounds = array<i64: 2, 1, 1>, scalar_prefetch = 0 : i64, scratch_operands = 0 : i64, tpu.core_type = #tpu.core_type<tc>, window_params = [{transform_indices = @transform_0, window_bounds = array<i64: 1, 2, 2, 256>}, {transform_indices = @transform_1, window_bounds = array<i64: 1, 2, 2, 256>}]} {
    %c0 = arith.constant 0 : index
    %c0_0 = arith.constant 0 : index
    %c0_1 = arith.constant 0 : index
    %c0_2 = arith.constant 0 : index
    %0 = vector.load %arg3[%c0, %c0_0, %c0_1, %c0_2] : memref<1x2x2x256xf32, #tpu.memory_space<vmem>>, vector<1x2x1x256xf32>
    %1 = vector.shape_cast %0 : vector<1x2x1x256xf32> to vector<1x2x256xf32>
    %c0_3 = arith.constant 0 : index
    %c0_4 = arith.constant 0 : index
    %c0_5 = arith.constant 0 : index
    %c0_6 = arith.constant 0 : index
    %2 = vector.load %arg4[%c0_3, %c0_4, %c0_5, %c0_6] : memref<1x2x2x256xf32, #tpu.memory_space<vmem>>, vector<1x1x2x256xf32>
    %3 = vector.shape_cast %2 : vector<1x1x2x256xf32> to vector<1x2x256xf32>
    %4 = vector.shape_cast %1 : vector<1x2x256xf32> to vector<1x1x2x256xf32>
    tpu.vector_store %arg4[%c0_3, %c0_4, %c0_5, %c0_6], %4 {strides = array<i32>} : memref<1x2x2x256xf32, #tpu.memory_space<vmem>>, vector<1x1x2x256xf32>,
    %c0_7 = arith.constant 0 : index
    %c0_8 = arith.constant 0 : index
    %c1 = arith.constant 1 : index
    %c0_9 = arith.constant 0 : index
    %5 = vector.load %arg3[%c0_7, %c0_8, %c1, %c0_9] : memref<1x2x2x256xf32, #tpu.memory_space<vmem>>, vector<1x2x1x256xf32>
    %6 = vector.shape_cast %5 : vector<1x2x1x256xf32> to vector<1x2x256xf32>
    %c0_10 = arith.constant 0 : index
    %c1_11 = arith.constant 1 : index
    %c0_12 = arith.constant 0 : index
    %c0_13 = arith.constant 0 : index
    %7 = vector.load %arg4[%c0_10, %c1_11, %c0_12, %c0_13] : memref<1x2x2x256xf32, #tpu.memory_space<vmem>>, vector<1x1x2x256xf32>
    %8 = vector.shape_cast %7 : vector<1x1x2x256xf32> to vector<1x2x256xf32>
    %9 = vector.shape_cast %6 : vector<1x2x256xf32> to vector<1x1x2x256xf32>
    tpu.vector_store %arg4[%c0_10, %c1_11, %c0_12, %c0_13], %9 {strides = array<i32>} : memref<1x2x2x256xf32, #tpu.memory_space<vmem>>, vector<1x1x2x256xf32>,
    return
  }
  func.func @transform_0(%arg0: i32, %arg1: i32, %arg2: i32) -> (i32, i32, i32, i32) {
    %c0_i32 = arith.constant 0 : i32
    %c0_i32_0 = arith.constant 0 : i32
    return %arg0, %c0_i32, %arg2, %arg1 : i32, i32, i32, i32
  }
  func.func @transform_1(%arg0: i32, %arg1: i32, %arg2: i32) -> (i32, i32, i32, i32) {
    %c0_i32 = arith.constant 0 : i32
    %c0_i32_0 = arith.constant 0 : i32
    return %arg0, %arg2, %c0_i32, %arg1 : i32, i32, i32, i32
  }
}

</mosaic_0001>

<llo_original>
// kernel: tpu_custom_call.1
$region0: #{tpu_custom_call.1}
  #allocation0 [shape = 'u32[]', space=smem, size = 0x4, offset = 0x4, fixed_abs, tag = 'smem constant byte address 0x4 - core index']
  #allocation1 [shape = 'u32[144,128]{1,0:T(1,128)}', space=vmem, size = 0x12000, scoped, tag = 'internal scratch']
  %s0 = inlined_call_operand.hbm [shape: f32[2,2,2,256], index: 0, kind: input, shape index: {}]
  %s1 = inlined_call_operand.hbm [shape: f32[2,2,2,256], index: 1, kind: output, shape index: {}]
  %s2 = sld [smem:[#allocation0]]
  $region41: #{tpu_custom_call.1} parent=0
    _
  %s4 = ssub.s32 1, %s2
  %s5 = scalar_select 0, %s4, %s2
  $region1: #{tpu_custom_call.1} parent=0
    #allocation2 [shape = 'u8[8192]{0}', space=vmem, size = 0x2000, scoped, tag = 'input window, operand 0']
    #allocation3 [shape = 's32[2]{0}', space=sflag, size = 0x8, scoped, tag = 'scoped memory for tpu_custom_call.1']
    #allocation4 [shape = 's32[2]{0}', space=sflag, size = 0x8, scoped, tag = 'scoped memory for tpu_custom_call.1']
    #allocation5 [shape = 'u8[8192]{0}', space=vmem, size = 0x2000, scoped, tag = 'output window, operand 0']
    %6 = vsyncpa [#allocation3], 0
    %s7 = scalar_lea.sflag [#allocation3], 1
    %8 = vsyncpa %s7, 0
    %9 = vsyncpa [#allocation4], 0
    %s10 = scalar_lea.sflag [#allocation4], 1
    %11 = vsyncpa %s10, 0
    loop: start=0, step=1, limit=4
    $region2: #{tpu_custom_call.1} parent=1 // loop_pre_header
      _
    $region3: #{tpu_custom_call.1} parent=1 // loop_header
      %s13 = sphi 0, %s17
      %p14 = scmp.ge.s32.totalorder %s13, 4
      %s20 = sphi 0, %s39
      %s21 = sphi 0, %s35
      %s22 = sphi 0, %s31
      %s23 = sphi 0, %s20
      %s24 = sphi 0, %s21
      %s25 = sphi 0, %s22
      %s26 = sphi 0, %s23
      %s27 = sphi 0, %s24
      %s28 = sphi 0, %s25
      %s46 = sphi 0, %s48
      %s49 = sphi 0, %s46
      %s50 = sphi 0, %s49
      %s66 = sphi 0, %s50
      %s76 = sphi 0, %s78
      %s79 = sphi 0, %s76
      %s80 = sphi 0, %s79
      %s96 = sphi 0, %s80
    $region4: #{tpu_custom_call.1} parent=1 // loop_header_branch
      %16 = sbr.rel (%p14) target = $region8
    $region5: #{tpu_custom_call.1} parent=1 // loop_body
      %s18 = ssub.s32 %s13, 1
      %s19 = ssub.s32 %s13, 2
      %s29 = sadd.s32 1, %s22
      %p30 = scmp.ge.s32.totalorder %s29, 1
      %s31 = scalar_select %p30, 0, %s29
      %s32 = sadd.s32 1, %s21
      %s33 = scalar_select %p30, %s32, %s21
      %p34 = scmp.ge.s32.totalorder %s33, 1
      %s35 = scalar_select %p34, 0, %s33
      %s36 = sadd.s32 1, %s20
      %s37 = scalar_select %p34, %s36, %s20
      %p38 = scmp.ge.s32.totalorder %s37, 2
      %s39 = scalar_select %p38, 0, %s37
      %s40 = ssub.s32 %s20, %s39
      %s41 = ssub.s32 %s22, %s31
      %s42 = sor.u32 %s40, %s41
      %s43 = ssub.s32 %s21, %s35
      %s44 = sor.u32 %s42, %s43
      %p45 = scmp.eq.s32.totalorder %s44, 0
      %s47 = sadd.s32 %s46, 1
      %s48 = scalar_select %p45, %s46, %s47
      %p51 = pneg %p45
      %p52 = scmp.eq.s32.totalorder %s13, 1
      %p53 = por %p51, %p52
      %p54 = scmp.ne.s32.totalorder %s46, %s49
      %p55 = scmp.eq.s32.totalorder %s13, 0
      %p56 = por %p54, %p55
      %p57 = scmp.ne.s32.totalorder %s46, %s49
      %p58 = scmp.eq.s32.totalorder %s18, 1
      %p59 = por %p57, %p58
      %p60 = scmp.ne.s32.totalorder %s49, %s50
      %p61 = scmp.eq.s32.totalorder %s18, 0
      %p62 = por %p60, %p61
      %p63 = scmp.ne.s32.totalorder %s49, %s50
      %p64 = scmp.eq.s32.totalorder %s19, 1
      %p65 = por %p63, %p64
      %p67 = scmp.ne.s32.totalorder %s50, %s66
      %p68 = scmp.eq.s32.totalorder %s19, 0
      %p69 = por %p67, %p68
      %s70 = ssub.s32 %s20, %s39
      %s71 = ssub.s32 %s22, %s31
      %s72 = sor.u32 %s70, %s71
      %s73 = ssub.s32 %s21, %s35
      %s74 = sor.u32 %s72, %s73
      %p75 = scmp.eq.s32.totalorder %s74, 0
      %s77 = sadd.s32 %s76, 1
      %s78 = scalar_select %p75, %s76, %s77
      %p81 = pneg %p75
      %p82 = scmp.eq.s32.totalorder %s13, 1
      %p83 = por %p81, %p82
      %p84 = scmp.ne.s32.totalorder %s76, %s79
      %p85 = scmp.eq.s32.totalorder %s13, 0
      %p86 = por %p84, %p85
      %p87 = scmp.ne.s32.totalorder %s76, %s79
      %p88 = scmp.eq.s32.totalorder %s18, 1
      %p89 = por %p87, %p88
      %p90 = scmp.ne.s32.totalorder %s79, %s80
      %p91 = scmp.eq.s32.totalorder %s18, 0
      %p92 = por %p90, %p91
      %p93 = scmp.ne.s32.totalorder %s79, %s80
      %p94 = scmp.eq.s32.totalorder %s19, 1
      %p95 = por %p93, %p94
      %p97 = scmp.ne.s32.totalorder %s80, %s96
      %p98 = scmp.eq.s32.totalorder %s19, 0
      %p99 = por %p97, %p98
      %p100 = scmp.le.s32.totalorder 1, %s13
      %p101 = scmp.lt.s32.totalorder %s13, 3
      %p102 = pnand %p100, %p101
      %p103 = pneg %p102
      // Predicated region
      $region9: #{tpu_custom_call.1} parent=5 // pred_check
        _
      $region10: #{tpu_custom_call.1} parent=5 // pred_check_branch
        %105 = sbr.rel (%p102) target = $region12
      $region11: #{tpu_custom_call.1} parent=5 // pred_region
        %s106 = ssub.s32 %s13, 1
      $region12: #{tpu_custom_call.1} parent=5 // pred_fallthru
        _
      %p107 = scmp.lt.s32.totalorder %s13, 2
      // Predicated region
      $region13: #{tpu_custom_call.1} parent=5 // pred_check
        %p108 = pneg %p107
      $region14: #{tpu_custom_call.1} parent=5 // pred_check_branch
        %110 = sbr.rel (%p108) target = $region16
      $region15: #{tpu_custom_call.1} parent=5 // pred_region
        // Predicated region
        $region17: #{tpu_custom_call.1} parent=15 // pred_check
          %p111 = pneg %p56
        $region18: #{tpu_custom_call.1} parent=15 // pred_check_branch
          %113 = sbr.rel (%p111) target = $region20
        $region19: #{tpu_custom_call.1} parent=15 // pred_region
          %s114 = sand.u32 %s46, 1
          %s115 = scalar_lea.sflag [#allocation3], %s114
          %s116 = sand.u32 %s46, 1
          %s117 = smul.addr %s116, 8
          %s118 = scalar_lea.vmem [#allocation2], %s117
          %s119 = smul.u32 2, %s21
          %s121 = ssub.s32 128, 128
          %122 = vsyncadd %s115, %s121
          %s123 = smul.addr %s22, 2
          %s124 = sadd.s32 %s119, %s123
          %s125 = smul.addr %s20, 4
          %s126 = sadd.s32 %s124, %s125
          %s127 = smul.addr %s126, 32
          %s128 = scalar_lea.hbm %s0, %s127
          %s129 = sshll.u32 %s118, 4
          %s130 = int_to_ptr.vmem [resolvable:$true] %s129
          %135 = dma.hbm_to_vmem [thread:$0]  %s128, 128, %s130, %s115, 64, 64, 4
        $region20: #{tpu_custom_call.1} parent=15 // pred_fallthru
          _
      $region16: #{tpu_custom_call.1} parent=5 // pred_fallthru
        _
      %p136 = scmp.le.s32.totalorder 1, %s13
      %p137 = scmp.lt.s32.totalorder %s13, 3
      %p138 = pnand %p136, %p137
      %p139 = pneg %p138
      // Predicated region
      $region21: #{tpu_custom_call.1} parent=5 // pred_check
        _
      $region22: #{tpu_custom_call.1} parent=5 // pred_check_branch
        %141 = sbr.rel (%p138) target = $region24
      $region23: #{tpu_custom_call.1} parent=5 // pred_region
        %s142 = ssub.s32 %s13, 1
        %s143 = sand.u32 %s49, 1
        %s144 = scalar_lea.sflag [#allocation3], %s143
        %s145 = sand.u32 %s49, 1
        %s146 = smul.addr %s145, 8
        %s147 = scalar_lea.vmem [#allocation2], %s146
        // Predicated region
        $region25: #{tpu_custom_call.1} parent=23 // pred_check
          %p148 = pneg %p62
        $region26: #{tpu_custom_call.1} parent=23 // pred_check_branch
          %150 = sbr.rel (%p148) target = $region28
        $region27: #{tpu_custom_call.1} parent=23 // pred_region
          %151 = dma.done %s144, 128
        $region28: #{tpu_custom_call.1} parent=23 // pred_fallthru
          _
        %s152 = sand.u32 %s49, 1
        %s153 = scalar_lea.sflag [#allocation3], %s152
        %s154 = sand.u32 %s49, 1
        %s155 = smul.addr %s154, 8
        %s156 = scalar_lea.vmem [#allocation2], %s155
        %p157 = pneg %p62
        %p158 = pneg %p59
        %p159 = pneg %p92
        %p160 = pneg %p89
        %s161 = sand.u32 %s79, 1
        %s162 = scalar_lea.sflag [#allocation4], %s161
        %s163 = sand.u32 %s79, 1
        %s164 = smul.addr %s163, 8
        %s165 = scalar_lea.vmem [#allocation5], %s164
        %s166 = smul.u32 2, %s24
        %s167 = smul.u32 2, %s25
        %s168 = smul.u32 2, %s24
        %v169 = vld [vmem:[%s147] ss:$2 sm:$0x3]
        %s170 = scalar_lea.vmem %s147, 4 [#allocation2]
        %v171 = vld [vmem:[%s170] ss:$2 sm:$0x3]
        %v174 = vcombine.low %v169, %v171
        %v176 = vunpack.c.l.s4 1935823168
        %v177 = vunpack.c.0.s8 %v176
        %v178 = vlaneseq
        %v179 = vshrl.u32 %v178, 7
        %v180 = vsub.s32 %v177, %v179
        %v181 = vrot.slane %v174, %v180
        %183 = vst [vmem:[%s165] sm:$0xf] %v181
        %s184 = scalar_lea.vmem %s147, 1 [#allocation2]
        %v185 = vld [vmem:[%s184] ss:$2 sm:$0x3]
        %s186 = scalar_lea.vmem %s147, 5 [#allocation2]
        %v187 = vld [vmem:[%s186] ss:$2 sm:$0x3]
        %v190 = vcombine.low %v185, %v187
        %v192 = vunpack.c.l.s4 1935823168
        %v193 = vunpack.c.0.s8 %v192
        %v194 = vlaneseq
        %v195 = vshrl.u32 %v194, 7
        %v196 = vsub.s32 %v193, %v195
        %v197 = vrot.slane %v190, %v196
        %s199 = scalar_lea.vmem %s165, 4 [#allocation5]
        %200 = vst [vmem:[%s199] sm:$0xf] %v197
        %s201 = sand.u32 %s79, 1
        %s202 = scalar_lea.sflag [#allocation4], %s201
        %s203 = sand.u32 %s79, 1
        %s204 = smul.addr %s203, 8
        %s205 = scalar_lea.vmem [#allocation5], %s204
        // Predicated region
        $region29: #{tpu_custom_call.1} parent=23 // pred_check
          %p206 = pneg %p89
        $region30: #{tpu_custom_call.1} parent=23 // pred_check_branch
          %208 = sbr.rel (%p206) target = $region32
        $region31: #{tpu_custom_call.1} parent=23 // pred_region
          %s209 = smul.u32 2, %s25
          %s210 = smul.u32 2, %s24
          %s212 = ssub.s32 128, 128
          %213 = vsyncadd %s202, %s212
          %s214 = smul.addr %s209, 2
          %s215 = sadd.s32 %s210, %s214
          %s216 = smul.addr %s23, 4
          %s217 = sadd.s32 %s215, %s216
          %s218 = smul.addr %s217, 32
          %s219 = scalar_lea.hbm %s1, %s218
          %s220 = sshll.u32 %s205, 4
          %s221 = int_to_ptr.vmem [resolvable:$true] %s220
          %226 = dma.vmem_to_hbm [thread:$0]  %s221, 128, %s219, %s202, 64, 64, 4
        $region32: #{tpu_custom_call.1} parent=23 // pred_fallthru
          _
      $region24: #{tpu_custom_call.1} parent=5 // pred_fallthru
        _
      %p227 = scmp.le.s32.totalorder 2, %s13
      // Predicated region
      $region33: #{tpu_custom_call.1} parent=5 // pred_check
        %p228 = pneg %p227
      $region34: #{tpu_custom_call.1} parent=5 // pred_check_branch
        %230 = sbr.rel (%p228) target = $region36
      $region35: #{tpu_custom_call.1} parent=5 // pred_region
        %s231 = ssub.s32 %s13, 2
        // Predicated region
        $region37: #{tpu_custom_call.1} parent=35 // pred_check
          %p232 = pneg %p95
        $region38: #{tpu_custom_call.1} parent=35 // pred_check_branch
          %234 = sbr.rel (%p232) target = $region40
        $region39: #{tpu_custom_call.1} parent=35 // pred_region
          %s235 = sand.u32 %s80, 1
          %s236 = scalar_lea.sflag [#allocation4], %s235
          %s237 = sand.u32 %s80, 1
          %s238 = smul.addr %s237, 8
          %s239 = scalar_lea.vmem [#allocation5], %s238
          %240 = dma.done %s236, 128
        $region40: #{tpu_custom_call.1} parent=35 // pred_fallthru
          _
      $region36: #{tpu_custom_call.1} parent=5 // pred_fallthru
        _
    $region6: #{tpu_custom_call.1} parent=1 // loop_footer
      %s17 = sadd.s32 1, %s13
    $region7: #{tpu_custom_call.1} parent=1 // loop_footer_branch
      %12 = sbr.rel target = $region3
    $region8: #{tpu_custom_call.1} parent=1 // loop_exit
      _
    %241 = vsyncpa [#allocation3], 1
    %s242 = scalar_lea.sflag [#allocation3], 1
    %243 = vsyncpa %s242, 1
    %244 = vsyncpa [#allocation4], 1
    %s245 = scalar_lea.sflag [#allocation4], 1
    %246 = vsyncpa %s245, 1

</llo_original>
